<compile_context>
chip_gen: v6e
topology: v6e:2x2x1
jax: 0.10.0
libtpu: 0.0.40
codegen_flags: <defaults>
</compile_context>

<pallas_src>
import functools

import jax
import jax.numpy as jnp
import numpy as np
from jax import lax
from jax.experimental import pallas as pl
from jax.experimental.pallas import tpu as pltpu

TAU = 1.0  # softmax temperature used by the reference module

# Coefficients of the 16 relaxed gates in the basis [1, a, b, a*b].
_GATE_BASIS = np.array(
    [
        [0, 0, 0, 0],    # 0  FALSE
        [0, 0, 0, 1],    # 1  a AND b
        [0, 1, 0, -1],   # 2  a AND NOT b
        [0, 1, 0, 0],    # 3  a
        [0, 0, 1, -1],   # 4  NOT a AND b
        [0, 0, 1, 0],    # 5  b
        [0, 1, 1, -2],   # 6  a XOR b
        [0, 1, 1, -1],   # 7  a OR b
        [1, -1, -1, 1],  # 8  NOR
        [1, -1, -1, 2],  # 9  XNOR
        [1, 0, -1, 0],   # 10 NOT b
        [1, 0, -1, 1],   # 11 a OR NOT b
        [1, -1, 0, 0],   # 12 NOT a
        [1, -1, 0, 1],   # 13 NOT a OR b
        [1, 0, 0, -1],   # 14 NAND
        [1, 0, 0, 0],    # 15 TRUE
    ],
    dtype=np.float32,
)  # (16, 4)


def _logic_ops_list(a, b):
    """Canonical 16 real-valued relaxations of binary logic gates (reference only)."""
    ab = a * b
    one = jnp.ones_like(a)
    zero = jnp.zeros_like(a)
    return [
        zero, ab, a - ab, a, b - ab, b, a + b - 2.0 * ab, a + b - ab,
        one - (a + b - ab), one - (a + b - 2.0 * ab), one - b, one - b + ab,
        one - a, one - a + ab, one - ab, one,
    ]


def _cdiv(a, b):
    return -(-a // b)


def _round_up(v, m):
    return ((v + m - 1) // m) * m


def _vmem_limit_bytes():
    """Generation-aware VMEM scoped limit (v7x has only 64 MiB per TensorCore)."""
    cap = None
    try:
        cap = getattr(pltpu.get_tpu_info(), "vmem_capacity_bytes", None)
    except Exception:
        cap = None
    if cap is None or cap <= 0 or cap <= 64 * 1024 * 1024:
        return 40 * 1024 * 1024      # safe everywhere, incl. v7x (64 MiB physical)
    return 64 * 1024 * 1024          # v5e / v6e (128 MiB physical)


# --------------------------------------------------------------------------------------
# Main fused kernel: K-tiled one-hot MXU gather + closed-form gate combine.
# --------------------------------------------------------------------------------------
def logic_gate_kernel(x_ref, idx_ref, coef_ref, o_ref, acc_ref):
    k = pl.program_id(2)

    @pl.when(k == 0)
    def _():
        acc_ref[...] = jnp.zeros_like(acc_ref)

    x = x_ref[...]                         # (tb, kc) f32, current K chunk
    idx = idx_ref[...]                     # (1, 2*tn) int32, global column indices
    kc = x.shape[1]

    # One-hot of operand indices restricted to this K chunk (0/1 is exact in bf16).
    rel = idx - k * kc                     # indices relative to this chunk
    iota = lax.broadcasted_iota(jnp.int32, (kc, idx.shape[1]), 0)
    onehot = (iota == rel).astype(jnp.bfloat16)            # (kc, 2*tn)

    # Exact 3-way bf16 split of x: x == hi + mid + lo exactly, so three single-pass
    # bf16 MXU dots against the exact one-hot reproduce the f32 gather bit-exactly.
    x_hi = x.astype(jnp.bfloat16)
    r1 = x - x_hi.astype(jnp.float32)
    x_mid = r1.astype(jnp.bfloat16)
    x_lo = (r1 - x_mid.astype(jnp.float32)).astype(jnp.bfloat16)

    gathered = jnp.dot(x_hi, onehot, preferred_element_type=jnp.float32)
    gathered += jnp.dot(x_mid, onehot, preferred_element_type=jnp.float32)
    gathered += jnp.dot(x_lo, onehot, preferred_element_type=jnp.float32)
    acc_ref[...] += gathered               # (tb, 2*tn): [a | b]

    @pl.when(k == pl.num_programs(2) - 1)
    def _():
        coef = coef_ref[...]               # (4, tn)
        tn = coef.shape[1]
        acc = acc_ref[...]
        a = acc[:, :tn]                    # lane offset multiple of 128 -> free slice
        b = acc[:, tn:]
        w0 = coef[0:1, :]
        w1 = coef[1:2, :]
        w2 = coef[2:3, :]
        w3 = coef[3:4, :]
        # W0 + W1*a + W2*b + W3*a*b factored to 6 VPU ops per element.
        o_ref[...] = w0 + w1 * a + b * (w2 + w3 * a)


# --------------------------------------------------------------------------------------
# Small-batch fallback kernel: gather done by XLA in the wrapper, elementwise combine.
# --------------------------------------------------------------------------------------
def _coef_combine_kernel(a_ref, b_ref, coef_ref, o_ref):
    a = a_ref[...]
    b = b_ref[...]
    coef = coef_ref[...]
    w0 = coef[0:1, :]
    w1 = coef[1:2, :]
    w2 = coef[2:3, :]
    w3 = coef[3:4, :]
    o_ref[...] = w0 + w1 * a + b * (w2 + w3 * a)


def _fallback(x, coef, input_idx, tile_n):
    B, _ = x.shape
    N = input_idx.shape[0]
    a = jnp.take(x, input_idx[:, 0], axis=1)       # (B, N) exact XLA gather
    b = jnp.take(x, input_idx[:, 1], axis=1)

    tn = min(tile_n, _round_up(N, 128))
    N_pad = _round_up(N, tn)
    Bp = _round_up(B, 8)
    a = jnp.pad(a, ((0, Bp - B), (0, N_pad - N)))
    b = jnp.pad(b, ((0, Bp - B), (0, N_pad - N)))
    coef_p = jnp.pad(coef, ((0, 0), (0, N_pad - N)))

    out = pl.pallas_call(
        _coef_combine_kernel,
        out_shape=jax.ShapeDtypeStruct((Bp, N_pad), jnp.float32),
        grid_spec=pltpu.PrefetchScalarGridSpec(
            num_scalar_prefetch=0,
            grid=(N_pad // tn,),
            in_specs=[
                pl.BlockSpec((Bp, tn), lambda j: (0, j)),
                pl.BlockSpec((Bp, tn), lambda j: (0, j)),
                pl.BlockSpec((4, tn), lambda j: (0, j)),
            ],
            out_specs=pl.BlockSpec((Bp, tn), lambda j: (0, j)),
        ),
        compiler_params=pltpu.CompilerParams(
            dimension_semantics=("parallel",),
            vmem_limit_bytes=_vmem_limit_bytes(),
        ),
    )(a, b, coef_p)
    return out[:B, :N]


# --------------------------------------------------------------------------------------
# Wrapper.
# --------------------------------------------------------------------------------------
@functools.partial(jax.jit, static_argnames=("tile_n", "tile_b", "tile_k"))
def logic_gate_layer(x, gate_weights, input_idx, *, tile_n=512, tile_b=256, tile_k=512):
    """x: (B, K) f32, gate_weights: (N, 16) f32, input_idx: (N, 2) int -> (B, N) f32."""
    x = x.astype(jnp.float32)
    gate_weights = gate_weights.astype(jnp.float32)
    input_idx = input_idx.astype(jnp.int32)

    B, K = x.shape
    N = gate_weights.shape[0]

    # Hoisted softmax + projection onto the {1, a, b, ab} basis -> (4, N) coefficients.
    sw = jax.nn.softmax(gate_weights * (1.0 / TAU), axis=1)          # (N, 16)
    coef = (sw @ jnp.asarray(_GATE_BASIS)).T                         # (4, N)

    # Batch tile chosen so padding is bounded (no near-2x blowup for e.g. B=260).
    n_i = _cdiv(B, tile_b)
    tb = _round_up(_cdiv(B, n_i), 8)

    # Small-batch fallback: with a tiny batch tile the one-hot matmul uses a sliver of
    # the MXU; let XLA gather and run only the coefficient combine as a Pallas kernel.
    if tb < 64:
        return _fallback(x, coef, input_idx, tile_n)

    B_pad = n_i * tb

    kc = min(tile_k, _round_up(K, 128))       # K chunk: lane-aligned, VMEM-bounded
    K_pad = _round_up(K, kc)
    tn = min(tile_n, _round_up(N, 128))       # neuron tile: lane-dense multiple of 128
    N_pad = _round_up(N, tn)
    nj = N_pad // tn
    nk = K_pad // kc

    # Zero-pad: padded K columns never match any index; padded neurons get index 0 and
    # zero coefficients; padded batch rows are sliced off.
    x_p = jnp.pad(x, ((0, B_pad - B), (0, K_pad - K)))
    coef_p = jnp.pad(coef, ((0, 0), (0, N_pad - N)))

    # Operand indices laid out per neuron tile as [a-indices | b-indices] so both
    # gathers are one MXU dot per K chunk.
    idx_p = jnp.pad(input_idx, ((0, N_pad - N), (0, 0)))             # (N_pad, 2)
    idx_t = idx_p.T.reshape(2, nj, tn)                               # (2, nj, tn)
    idx2 = jnp.transpose(idx_t, (1, 0, 2)).reshape(1, 2 * N_pad)     # (1, 2*N_pad)

    # Megacore: shard along batch when possible so x blocks are not re-streamed per core.
    dims = (("parallel", "arbitrary", "arbitrary") if n_i >= 2
            else ("parallel", "parallel", "arbitrary"))

    out = pl.pallas_call(
        logic_gate_kernel,
        out_shape=jax.ShapeDtypeStruct((B_pad, N_pad), jnp.float32),
        grid_spec=pltpu.PrefetchScalarGridSpec(
            num_scalar_prefetch=0,
            grid=(n_i, nj, nk),
            in_specs=[
                pl.BlockSpec((tb, kc), lambda i, j, k: (i, k)),        # x chunk
                pl.BlockSpec((1, 2 * tn), lambda i, j, k: (0, j)),     # fused indices
                pl.BlockSpec((4, tn), lambda i, j, k: (0, j)),         # coefficients
            ],
            out_specs=pl.BlockSpec((tb, tn), lambda i, j, k: (i, j)),
            scratch_shapes=[pltpu.VMEM((tb, 2 * tn), jnp.float32)],    # [a | b] accumulator
        ),
        compiler_params=pltpu.CompilerParams(
            dimension_semantics=dims,
            vmem_limit_bytes=_vmem_limit_bytes(),
        ),
    )(x_p, idx2, coef_p)

    if B_pad != B or N_pad != N:
        out = out[:B, :N]
    return out


def logic_gate_layer_ref(x, gate_weights, input_idx):
    """Pure-JAX reference mirroring the PyTorch forward (unrolled 16 gates)."""
    a = jnp.take(x, input_idx[:, 0], axis=1)                 # (B, N)
    b = jnp.take(x, input_idx[:, 1], axis=1)                 # (B, N)
    ops = jnp.stack(_logic_ops_list(a, b), axis=1)           # (B, 16, N)
    ops = jnp.transpose(ops, (0, 2, 1))                      # (B, N, 16)
    sw = jax.nn.softmax(gate_weights / TAU, axis=1)[None]    # (1, N, 16)
    return jnp.sum(sw * ops, axis=2)                         # (B, N)


if __name__ == "__main__":
    base_key = jax.random.PRNGKey(0)

    def run_case(batch, input_size, num_neurons, **tiles):
        k_x, k_w, k_idx = jax.random.split(jax.random.fold_in(base_key, batch), 3)
        x = jax.random.uniform(k_x, (batch, input_size), dtype=jnp.float32)
        gw = jax.random.normal(k_w, (num_neurons, 16), dtype=jnp.float32)
        idx = jax.random.randint(k_idx, (num_neurons, 2), 0, input_size, dtype=jnp.int32)

        out = jax.block_until_ready(logic_gate_layer(x, gw, idx, **tiles))
        ref = jax.block_until_ready(logic_gate_layer_ref(x, gw, idx))
        assert out.shape == (batch, num_neurons)
        np.testing.assert_allclose(np.asarray(out), np.asarray(ref), atol=1e-5, rtol=1e-5)

    # Small batch -> XLA gather + elementwise Pallas combine (fallback path).
    run_case(batch=8, input_size=32, num_neurons=256)

    # Larger batch, unaligned sizes -> fused MXU-gather kernel exercising K-tiling,
    # batch/neuron/input padding and a (2, 3, 3) grid.
    run_case(batch=200, input_size=300, num_neurons=640,
             tile_n=256, tile_b=128, tile_k=128)

    print("KERNEL_OK")
</pallas_src>

<mosaic_0001>
module attributes {stable_mosaic.version = 11 : i64} {
  func.func @_coef_combine_kernel(%arg0: i32, %arg1: memref<8x256xf32, #tpu.memory_space<vmem>>, %arg2: memref<8x256xf32, #tpu.memory_space<vmem>>, %arg3: memref<4x256xf32, #tpu.memory_space<vmem>>, %arg4: memref<8x256xf32, #tpu.memory_space<vmem>>) attributes {dimension_semantics = [#tpu.dimension_semantics<parallel>], iteration_bounds = array<i64: 1>, scalar_prefetch = 0 : i64, scratch_operands = 0 : i64, tpu.core_type = #tpu.core_type<tc>, window_params = [{transform_indices = @transform_0, window_bounds = array<i64: 8, 256>}, {transform_indices = @transform_1, window_bounds = array<i64: 8, 256>}, {transform_indices = @transform_2, window_bounds = array<i64: 4, 256>}, {transform_indices = @transform_3, window_bounds = array<i64: 8, 256>}]} {
    %c0 = arith.constant 0 : index
    %c0_0 = arith.constant 0 : index
    %0 = vector.load %arg1[%c0, %c0_0] : memref<8x256xf32, #tpu.memory_space<vmem>>, vector<8x256xf32>
    %c0_1 = arith.constant 0 : index
    %c0_2 = arith.constant 0 : index
    %1 = vector.load %arg2[%c0_1, %c0_2] : memref<8x256xf32, #tpu.memory_space<vmem>>, vector<8x256xf32>
    %c0_3 = arith.constant 0 : index
    %c0_4 = arith.constant 0 : index
    %2 = vector.load %arg3[%c0_3, %c0_4] : memref<4x256xf32, #tpu.memory_space<vmem>>, vector<4x256xf32>
    %3 = vector.extract_strided_slice %2 {offsets = [0, 0], sizes = [1, 256], strides = [1, 1]} : vector<4x256xf32> to vector<1x256xf32>
    %4 = vector.extract_strided_slice %2 {offsets = [1, 0], sizes = [1, 256], strides = [1, 1]} : vector<4x256xf32> to vector<1x256xf32>
    %5 = vector.extract_strided_slice %2 {offsets = [2, 0], sizes = [1, 256], strides = [1, 1]} : vector<4x256xf32> to vector<1x256xf32>
    %6 = vector.extract_strided_slice %2 {offsets = [3, 0], sizes = [1, 256], strides = [1, 1]} : vector<4x256xf32> to vector<1x256xf32>
    %7 = vector.broadcast %4 : vector<1x256xf32> to vector<8x256xf32>
    %8 = arith.mulf %7, %0 : vector<8x256xf32>
    %9 = vector.broadcast %3 : vector<1x256xf32> to vector<8x256xf32>
    %10 = arith.addf %9, %8 : vector<8x256xf32>
    %11 = vector.broadcast %6 : vector<1x256xf32> to vector<8x256xf32>
    %12 = arith.mulf %11, %0 : vector<8x256xf32>
    %13 = vector.broadcast %5 : vector<1x256xf32> to vector<8x256xf32>
    %14 = arith.addf %13, %12 : vector<8x256xf32>
    %15 = arith.mulf %1, %14 : vector<8x256xf32>
    %16 = arith.addf %10, %15 : vector<8x256xf32>
    %c0_5 = arith.constant 0 : index
    %c0_6 = arith.constant 0 : index
    %17 = vector.load %arg4[%c0_5, %c0_6] : memref<8x256xf32, #tpu.memory_space<vmem>>, vector<8x256xf32>
    tpu.vector_store %arg4[%c0_5, %c0_6], %16 {strides = array<i32>} : memref<8x256xf32, #tpu.memory_space<vmem>>, vector<8x256xf32>,
    return
  }
  func.func @transform_0(%arg0: i32) -> (i32, i32) {
    %c0_i32 = arith.constant 0 : i32
    %c0_i32_0 = arith.constant 0 : i32
    return %c0_i32, %arg0 : i32, i32
  }
  func.func @transform_1(%arg0: i32) -> (i32, i32) {
    %c0_i32 = arith.constant 0 : i32
    %c0_i32_0 = arith.constant 0 : i32
    return %c0_i32, %arg0 : i32, i32
  }
  func.func @transform_2(%arg0: i32) -> (i32, i32) {
    %c0_i32 = arith.constant 0 : i32
    %c0_i32_0 = arith.constant 0 : i32
    return %c0_i32, %arg0 : i32, i32
  }
  func.func @transform_3(%arg0: i32) -> (i32, i32) {
    %c0_i32 = arith.constant 0 : i32
    %c0_i32_0 = arith.constant 0 : i32
    return %c0_i32, %arg0 : i32, i32
  }
}

</mosaic_0001>

<llo_original>
// kernel: logic_gate_layer.1
$region0: #{logic_gate_layer.1}
  #allocation0 [shape = 'u32[]', space=smem, size = 0x4, offset = 0x4, fixed_abs, tag = 'smem constant byte address 0x4 - core index']
  #allocation1 [shape = 'u32[144,128]{1,0:T(1,128)}', space=vmem, size = 0x12000, scoped, tag = 'internal scratch']
  %s0 = inlined_call_operand.vmem [shape: f32[8,256], index: 0, kind: input, shape index: {}]
  %s1 = inlined_call_operand.vmem [shape: f32[8,256], index: 1, kind: input, shape index: {}]
  %s2 = inlined_call_operand.vmem [shape: f32[4,256], index: 2, kind: input, shape index: {}]
  %s3 = inlined_call_operand.hbm [shape: f32[8,256], index: 3, kind: output, shape index: {}]
  %s4 = sld [smem:[#allocation0]]
  $region22: #{logic_gate_layer.1} parent=0
    _
  %s6 = ssub.s32 1, %s4
  %s7 = scalar_select 0, %s6, %s4
  $region1: #{logic_gate_layer.1} parent=0
    #allocation2 [shape = 'u8[8192]{0}', space=vmem, size = 0x2000, scoped, tag = 'output window, operand 0, single buffered']
    #allocation3 [shape = 's32[1]{0}', space=sflag, size = 0x4, scoped, tag = 'scoped memory for logic_gate_layer.1']
    %8 = vsyncpa [#allocation3], 0
    // Predicated region
    $region2: #{logic_gate_layer.1} parent=1 // pred_check
      _
    $region3: #{logic_gate_layer.1} parent=1 // pred_check_branch
      %10 = sbr.rel (0) target = $region5
    $region4: #{logic_gate_layer.1} parent=1 // pred_region
      _
    $region5: #{logic_gate_layer.1} parent=1 // pred_fallthru
      _
    // Predicated region
    $region6: #{logic_gate_layer.1} parent=1 // pred_check
      _
    $region7: #{logic_gate_layer.1} parent=1 // pred_check_branch
      %12 = sbr.rel (0) target = $region9
    $region8: #{logic_gate_layer.1} parent=1 // pred_region
      _
    $region9: #{logic_gate_layer.1} parent=1 // pred_fallthru
      _
    // Predicated region
    $region10: #{logic_gate_layer.1} parent=1 // pred_check
      _
    $region11: #{logic_gate_layer.1} parent=1 // pred_check_branch
      %14 = sbr.rel (0) target = $region13
    $region12: #{logic_gate_layer.1} parent=1 // pred_region
      _
    $region13: #{logic_gate_layer.1} parent=1 // pred_fallthru
      _
    %v15 = vld [vmem:[%s0] sm:$0xff]
    %v16 = vld [vmem:[%s0 + $0x8] sm:$0xff]
    %v17 = vld [vmem:[%s1] sm:$0xff]
    %v18 = vld [vmem:[%s1 + $0x8] sm:$0xff]
    %v19 = vld [vmem:[%s2] sm:$0xff]
    %v21 = vlaneseq
    %v22 = vshrl.u32 %v21, 7
    %v23 = vsub.s32 1, %v22
    %v24 = vrot.slane %v19, %v23
    %v25 = vlaneseq
    %v26 = vshrl.u32 %v25, 7
    %v27 = vsub.s32 5, %v26
    %v28 = vrot.slane %v19, %v27
    %v31 = vlaneseq
    %v32 = vshrl.u32 %v31, 7
    %v33 = vsub.s32 1, %v32
    %v34 = vrot.slane %v24, %v33
    %v35 = vlaneseq
    %v36 = vshrl.u32 %v35, 7
    %v37 = vsub.s32 1, %v36
    %v38 = vrot.slane %v28, %v37
    %v39 = vmul.f32 %v34, %v15
    %v40 = vmul.f32 %v38, %v16
    %v41 = vlaneseq
    %v42 = vshrl.u32 %v41, 7
    %v43 = vsub.s32 0, %v42
    %v44 = vrot.slane %v19, %v43
    %v45 = vlaneseq
    %v46 = vshrl.u32 %v45, 7
    %v47 = vsub.s32 4, %v46
    %v48 = vrot.slane %v19, %v47
    %v51 = vlaneseq
    %v52 = vshrl.u32 %v51, 7
    %v53 = vsub.s32 0, %v52
    %v54 = vrot.slane %v44, %v53
    %v55 = vlaneseq
    %v56 = vshrl.u32 %v55, 7
    %v57 = vsub.s32 0, %v56
    %v58 = vrot.slane %v48, %v57
    %v59 = vadd.f32 %v54, %v39
    %v60 = vadd.f32 %v58, %v40
    %v61 = vlaneseq
    %v62 = vshrl.u32 %v61, 7
    %v63 = vsub.s32 3, %v62
    %v64 = vrot.slane %v19, %v63
    %v65 = vlaneseq
    %v66 = vshrl.u32 %v65, 7
    %v67 = vsub.s32 7, %v66
    %v68 = vrot.slane %v19, %v67
    %v71 = vlaneseq
    %v72 = vshrl.u32 %v71, 7
    %v73 = vsub.s32 3, %v72
    %v74 = vrot.slane %v64, %v73
    %v75 = vlaneseq
    %v76 = vshrl.u32 %v75, 7
    %v77 = vsub.s32 3, %v76
    %v78 = vrot.slane %v68, %v77
    %v79 = vmul.f32 %v74, %v15
    %v80 = vmul.f32 %v78, %v16
    %v81 = vlaneseq
    %v82 = vshrl.u32 %v81, 7
    %v83 = vsub.s32 2, %v82
    %v84 = vrot.slane %v19, %v83
    %v85 = vlaneseq
    %v86 = vshrl.u32 %v85, 7
    %v87 = vsub.s32 6, %v86
    %v88 = vrot.slane %v19, %v87
    %v91 = vlaneseq
    %v92 = vshrl.u32 %v91, 7
    %v93 = vsub.s32 2, %v92
    %v94 = vrot.slane %v84, %v93
    %v95 = vlaneseq
    %v96 = vshrl.u32 %v95, 7
    %v97 = vsub.s32 2, %v96
    %v98 = vrot.slane %v88, %v97
    %v99 = vadd.f32 %v94, %v79
    %v100 = vadd.f32 %v98, %v80
    %v101 = vmul.f32 %v17, %v99
    %v102 = vmul.f32 %v18, %v100
    %v103 = vadd.f32 %v59, %v101
    %v104 = vadd.f32 %v60, %v102
    %105 = vst [vmem:[#allocation2] sm:$0xff] %v103
    %106 = vst [vmem:[#allocation2 + $0x8] sm:$0xff] %v104
    // Predicated region
    $region14: #{logic_gate_layer.1} parent=1 // pred_check
      _
    $region15: #{logic_gate_layer.1} parent=1 // pred_check_branch
      %108 = sbr.rel (0) target = $region17
    $region16: #{logic_gate_layer.1} parent=1 // pred_region
      %s110 = ssub.s32 256, 256
      %111 = vsyncadd [#allocation3], %s110
      %s113 = sshll.u32 [#allocation2], 4
      %s114 = int_to_ptr.vmem [resolvable:$true] %s113
      %116 = dma.vmem_to_hbm [thread:$0]  %s114, 256, %s3, [#allocation3]
    $region17: #{logic_gate_layer.1} parent=1 // pred_fallthru
      _
    // Predicated region
    $region18: #{logic_gate_layer.1} parent=1 // pred_check
      _
    $region19: #{logic_gate_layer.1} parent=1 // pred_check_branch
      %118 = sbr.rel (0) target = $region21
    $region20: #{logic_gate_layer.1} parent=1 // pred_region
      %119 = dma.done [#allocation3], 256
    $region21: #{logic_gate_layer.1} parent=1 // pred_fallthru
      _
    %120 = vsyncpa [#allocation3], 1

</llo_original>
